<compile_context>
chip_gen: v7x
topology: tpu7x:2x2x1
jax: 0.10.0
libtpu: 0.0.40
codegen_flags: <defaults>
</compile_context>

<pallas_src>
import functools

import jax
import jax.numpy as jnp
from jax.experimental import pallas as pl
from jax.experimental.pallas import tpu as pltpu


def gcn_kernel(x_ref, adj_ref, w_ref, b_ref, o_ref):
    # x_ref:   (M, units)  lane-dense node features for block_b batch elements
    # adj_ref: (M, M)      block-diagonal adjacency (block_b blocks of N x N)
    # w_ref:   (units, units)  pre-transposed Linear weight: (in, out)
    # b_ref:   (1, units)  float32 bias
    # o_ref:   (M, units)  output (out_dtype)
    support = jnp.dot(adj_ref[...], x_ref[...],
                      preferred_element_type=jnp.float32)      # (M, units) f32
    out = jnp.dot(support.astype(w_ref.dtype), w_ref[...],
                  preferred_element_type=jnp.float32)          # (M, units) f32
    out = out + b_ref[...]                                     # broadcast bias
    o_ref[...] = jnp.maximum(out, 0.0).astype(o_ref.dtype)


def _vmem_plan():
    """(scoped vmem limit to request, per-kernel budget for block sizing)."""
    try:
        cap = int(pltpu.get_tpu_info().vmem_capacity_bytes)
    except Exception:
        cap = 64 * 1024 * 1024          # conservative: v7x per-TC VMEM
    limit = min(cap // 2, 64 * 1024 * 1024)   # 32 MiB on v7x, 64 MiB on v5e/v6e
    budget = (limit * 3) // 4                 # headroom for compiler scratch
    return limit, budget


def _pick_block_b(B, N, units, in_itemsize, out_itemsize, *,
                  vmem_budget, row_align=256, target_rows=256, min_grid=2):
    """Pick block_b so M = block_b * N is MXU-friendly and fits VMEM.

    VMEM accounting uses padded tile sizes (last dim rounded to 128 lanes,
    second-minor dim rounded to the dtype sublane tile) and assumes double
    buffering of every tile.
    """
    def padded(rows, cols, itemsize):
        sublane = max(8, 32 // itemsize)        # 8 f32, 16 bf16, 32 int8/fp8
        pr = -(-rows // sublane) * sublane
        pc = -(-cols // 128) * 128
        return pr * pc * itemsize

    def fits(bb):
        m = bb * N
        per_step = (padded(m, m, in_itemsize)          # block-diag adj tile
                    + padded(m, units, in_itemsize)    # x tile
                    + padded(m, units, out_itemsize))  # output tile
        resident = padded(units, units, in_itemsize) + padded(1, units, 4)
        return 2 * (per_step + resident) <= vmem_budget

    divisors = [d for d in range(1, B + 1) if B % d == 0]
    fitting = [d for d in divisors if fits(d)] or [1]

    # Keep >= min_grid grid steps when possible so the batch axis can shard
    # across both TensorCores on a 2-TC chip (v7x).
    pool = [d for d in fitting if B // d >= min_grid] or fitting

    # Prefer the largest MXU-aligned M not exceeding target_rows; the
    # block-diagonal adjacency grows as M^2, so do not chase huge M.
    aligned = [d for d in pool if (d * N) % row_align == 0 and d * N <= target_rows]
    if aligned:
        return max(aligned)
    under = [d for d in pool if d * N <= target_rows]
    if under:
        return max(under)
    return min(pool)


def gcn_layer(x, adj, weight, bias, *, compute_dtype=jnp.bfloat16,
              out_dtype=jnp.float32, block_b=None):
    """Forward pass of GCNLayer.

    x:      (B, units, N)   features stored like the torch module (pre-permute)
    adj:    (B, N, N)
    weight: (units, units)  nn.Linear weight, (out_features, in_features)
    bias:   (units,)
    returns (B, N, units) in out_dtype
    """
    B, units, N = x.shape
    vmem_limit, vmem_budget = _vmem_plan()

    if block_b is None:
        block_b = _pick_block_b(
            B, N, units,
            jnp.dtype(compute_dtype).itemsize, jnp.dtype(out_dtype).itemsize,
            vmem_budget=vmem_budget)
    assert B % block_b == 0, (B, block_b)
    G = B // block_b
    M = block_b * N

    # Lane-dense, flattened x; MXU-native orientation for W; f32 bias.
    xt = jnp.transpose(x, (0, 2, 1)).reshape(B * N, units).astype(compute_dtype)
    wt = jnp.transpose(weight).astype(compute_dtype)               # (in, out)
    b2 = bias.astype(jnp.float32).reshape(1, units)

    # Block-diagonal adjacency per grid block: (G, M, M) flattened to (G*M, M).
    adj_r = adj.astype(compute_dtype).reshape(G, block_b, N, N)
    eye = jnp.eye(block_b, dtype=compute_dtype)
    adj_bd = (adj_r[:, :, :, None, :]
              * eye[None, :, None, :, None]).reshape(G * M, M)

    out = pl.pallas_call(
        gcn_kernel,
        out_shape=jax.ShapeDtypeStruct((B * N, units), out_dtype),
        grid=(G,),
        in_specs=[
            pl.BlockSpec((M, units), lambda i: (i, 0)),   # x tile
            pl.BlockSpec((M, M), lambda i: (i, 0)),       # block-diag adj tile
            pl.BlockSpec((units, units), lambda i: (0, 0)),
            pl.BlockSpec((1, units), lambda i: (0, 0)),
        ],
        out_specs=pl.BlockSpec((M, units), lambda i: (i, 0)),
        compiler_params=pltpu.CompilerParams(
            dimension_semantics=("parallel",),
            vmem_limit_bytes=vmem_limit),
    )(xt, adj_bd, wt, b2)

    return out.reshape(B, N, units)


def gcn_reference(x, adj, weight, bias, compute_dtype=jnp.float32):
    """Pure-JAX reference mirroring the kernel's dtype handling."""
    xt = jnp.transpose(x, (0, 2, 1)).astype(compute_dtype)
    adj_c = adj.astype(compute_dtype)
    wt = jnp.transpose(weight).astype(compute_dtype)
    support = jnp.einsum('bnk,bku->bnu', adj_c, xt,
                         preferred_element_type=jnp.float32)
    support = support.astype(compute_dtype)
    out = jnp.einsum('bnu,uv->bnv', support, wt,
                     preferred_element_type=jnp.float32)
    out = out + bias.astype(jnp.float32)[None, None, :]
    return jax.nn.relu(out)


if __name__ == "__main__":
    # Small shapes consistent with the module (units shrunk from 768 -> 128).
    B, units, N = 4, 128, 16

    key = jax.random.PRNGKey(0)
    kx, kadj, kw, kb = jax.random.split(key, 4)

    x = jax.random.normal(kx, (B, units, N), dtype=jnp.float32)
    # 0/1 adjacency with self loops (exactly representable in bf16).
    adj_raw = jax.random.uniform(kadj, (B, N, N), dtype=jnp.float32)
    adj = jnp.clip((adj_raw > 0.5).astype(jnp.float32)
                   + jnp.eye(N, dtype=jnp.float32)[None], 0.0, 1.0)

    # Deterministic nn.Linear(units, units) parameters.
    bound = 1.0 / jnp.sqrt(units)
    weight = jax.random.uniform(kw, (units, units), minval=-bound, maxval=bound,
                                dtype=jnp.float32)
    bias = jax.random.uniform(kb, (units,), minval=-bound, maxval=bound,
                              dtype=jnp.float32)

    run_bf16 = jax.jit(functools.partial(gcn_layer, compute_dtype=jnp.bfloat16))
    run_f32 = jax.jit(functools.partial(gcn_layer, compute_dtype=jnp.float32))
    run_bf16_out = jax.jit(functools.partial(
        gcn_layer, compute_dtype=jnp.bfloat16, out_dtype=jnp.bfloat16))

    out_bf16 = jax.block_until_ready(run_bf16(x, adj, weight, bias))
    out_f32 = jax.block_until_ready(run_f32(x, adj, weight, bias))
    out_bf16_o = jax.block_until_ready(run_bf16_out(x, adj, weight, bias))

    assert out_bf16.shape == (B, N, units)
    assert out_f32.shape == (B, N, units)
    assert out_bf16_o.shape == (B, N, units) and out_bf16_o.dtype == jnp.bfloat16

    # f32 parity path check against the plain f32 reference.
    ref_f32 = gcn_reference(x, adj, weight, bias, compute_dtype=jnp.float32)
    assert jnp.allclose(out_f32, ref_f32, atol=1e-4, rtol=1e-4)

    # bf16-input / f32-accumulate path check against a dtype-mirrored reference.
    ref_bf16 = gcn_reference(x, adj, weight, bias, compute_dtype=jnp.bfloat16)
    assert jnp.allclose(out_bf16, ref_bf16, atol=1e-3, rtol=1e-3)
    assert jnp.allclose(out_bf16_o.astype(jnp.float32), ref_bf16,
                        atol=1e-2, rtol=1e-2)

    print("KERNEL_OK")
</pallas_src>

<mosaic_0001>
module attributes {stable_mosaic.version = 11 : i64} {
  func.func @gcn_kernel(%arg0: i32, %arg1: memref<32x128xbf16, #tpu.memory_space<vmem>>, %arg2: memref<32x32xbf16, #tpu.memory_space<vmem>>, %arg3: memref<128x128xbf16, #tpu.memory_space<vmem>>, %arg4: memref<1x128xf32, #tpu.memory_space<vmem>>, %arg5: memref<32x128xf32, #tpu.memory_space<vmem>>) attributes {dimension_semantics = [#tpu.dimension_semantics<parallel>], iteration_bounds = array<i64: 2>, scalar_prefetch = 0 : i64, scratch_operands = 0 : i64, tpu.core_type = #tpu.core_type<tc>, window_params = [{transform_indices = @transform_0, window_bounds = array<i64: 32, 128>}, {transform_indices = @transform_1, window_bounds = array<i64: 32, 32>}, {pipeline_mode = #tpu.pipeline_mode<synchronous>, transform_indices = @transform_2, window_bounds = array<i64: 128, 128>}, {pipeline_mode = #tpu.pipeline_mode<synchronous>, transform_indices = @transform_3, window_bounds = array<i64: 1, 128>}, {transform_indices = @transform_4, window_bounds = array<i64: 32, 128>}]} {
    %c0 = arith.constant 0 : index
    %c0_0 = arith.constant 0 : index
    %0 = vector.load %arg2[%c0, %c0_0] : memref<32x32xbf16, #tpu.memory_space<vmem>>, vector<32x32xbf16>
    %c0_1 = arith.constant 0 : index
    %c0_2 = arith.constant 0 : index
    %1 = vector.load %arg1[%c0_1, %c0_2] : memref<32x128xbf16, #tpu.memory_space<vmem>>, vector<32x128xbf16>
    %cst = arith.constant dense<0.000000e+00> : vector<32x128xf32>
    %2 = tpu.matmul %0, %1, %cst {dimension_numbers = #tpu.dot_dimension_numbers<[1], [0], [0], [1], [0, 0, 1, 1], [], []>} : vector<32x32xbf16>, vector<32x128xbf16>, vector<32x128xf32> -> vector<32x128xf32>
    %3 = arith.truncf %2 : vector<32x128xf32> to vector<32x128xbf16>
    %c0_3 = arith.constant 0 : index
    %c0_4 = arith.constant 0 : index
    %4 = vector.load %arg3[%c0_3, %c0_4] : memref<128x128xbf16, #tpu.memory_space<vmem>>, vector<128x128xbf16>
    %cst_5 = arith.constant dense<0.000000e+00> : vector<32x128xf32>
    %5 = tpu.matmul %3, %4, %cst_5 {dimension_numbers = #tpu.dot_dimension_numbers<[1], [0], [0], [1], [0, 0, 1, 1], [], []>} : vector<32x128xbf16>, vector<128x128xbf16>, vector<32x128xf32> -> vector<32x128xf32>
    %c0_6 = arith.constant 0 : index
    %c0_7 = arith.constant 0 : index
    %6 = vector.load %arg4[%c0_6, %c0_7] : memref<1x128xf32, #tpu.memory_space<vmem>>, vector<1x128xf32>
    %7 = vector.broadcast %6 : vector<1x128xf32> to vector<32x128xf32>
    %8 = arith.addf %5, %7 : vector<32x128xf32>
    %cst_8 = arith.constant 0.000000e+00 : f32
    %9 = vector.broadcast %cst_8 : f32 to vector<32x128xf32>
    %10 = arith.maximumf %8, %9 : vector<32x128xf32>
    %c0_9 = arith.constant 0 : index
    %c0_10 = arith.constant 0 : index
    %11 = vector.load %arg5[%c0_9, %c0_10] : memref<32x128xf32, #tpu.memory_space<vmem>>, vector<32x128xf32>
    tpu.vector_store %arg5[%c0_9, %c0_10], %10 {strides = array<i32>} : memref<32x128xf32, #tpu.memory_space<vmem>>, vector<32x128xf32>,
    return
  }
  func.func @transform_0(%arg0: i32) -> (i32, i32) {
    %c0_i32 = arith.constant 0 : i32
    %c0_i32_0 = arith.constant 0 : i32
    return %arg0, %c0_i32 : i32, i32
  }
  func.func @transform_1(%arg0: i32) -> (i32, i32) {
    %c0_i32 = arith.constant 0 : i32
    %c0_i32_0 = arith.constant 0 : i32
    return %arg0, %c0_i32 : i32, i32
  }
  func.func @transform_2(%arg0: i32) -> (i32, i32) {
    %c0_i32 = arith.constant 0 : i32
    %c0_i32_0 = arith.constant 0 : i32
    %c0_i32_1 = arith.constant 0 : i32
    return %c0_i32, %c0_i32_0 : i32, i32
  }
  func.func @transform_3(%arg0: i32) -> (i32, i32) {
    %c0_i32 = arith.constant 0 : i32
    %c0_i32_0 = arith.constant 0 : i32
    %c0_i32_1 = arith.constant 0 : i32
    return %c0_i32, %c0_i32_0 : i32, i32
  }
  func.func @transform_4(%arg0: i32) -> (i32, i32) {
    %c0_i32 = arith.constant 0 : i32
    %c0_i32_0 = arith.constant 0 : i32
    return %arg0, %c0_i32 : i32, i32
  }
}

</mosaic_0001>

<llo_original>
// kernel: gcn_layer.1
$region0: #{gcn_layer.1}
  #allocation0 [shape = 'u32[]', space=smem, size = 0x4, offset = 0x4, fixed_abs, tag = 'smem constant byte address 0x4 - core index']
  #allocation1 [shape = 'u32[144,128]{1,0:T(1,128)}', space=vmem, size = 0x12000, scoped, tag = 'internal scratch']
  %s0 = inlined_call_operand.vmem [shape: bf16[64,128], index: 0, kind: input, shape index: {}]
  %s1 = inlined_call_operand.vmem [shape: bf16[64,32], index: 1, kind: input, shape index: {}]
  %s2 = inlined_call_operand.vmem [shape: bf16[128,128], index: 2, kind: input, shape index: {}]
  %s3 = inlined_call_operand.vmem [shape: f32[1,128], index: 3, kind: input, shape index: {}]
  %s4 = inlined_call_operand.hbm [shape: f32[64,128], index: 4, kind: output, shape index: {}]
  %s5 = sld [smem:[#allocation0]]
  $region49: #{gcn_layer.1} parent=0
    _
  %s7 = ssub.s32 1, %s5
  %s8 = scalar_select 0, %s7, %s5
  $region1: #{gcn_layer.1} parent=0
    #allocation2 [shape = 'u8[32768]{0}', space=vmem, size = 0x8000, scoped, tag = 'output window, operand 0']
    #allocation3 [shape = 's32[2]{0}', space=sflag, size = 0x8, scoped, tag = 'scoped memory for gcn_layer.1']
    %9 = vsyncpa [#allocation3], 0
    %s10 = scalar_lea.sflag [#allocation3], 1
    %11 = vsyncpa %s10, 0
    loop: start=0, step=1, limit=4
    $region2: #{gcn_layer.1} parent=1 // loop_pre_header
      _
    $region3: #{gcn_layer.1} parent=1 // loop_header
      %s13 = sphi 0, %s17
      %p14 = scmp.ge.s32.totalorder %s13, 4
      %s23 = sphi 0, %s25
      %s26 = sphi 0, %s23
      %s27 = sphi 0, %s26
      %s43 = sphi 0, %s27
      %s49 = sphi 0, %s51
      %s52 = sphi 0, %s49
      %s53 = sphi 0, %s52
      %s69 = sphi 0, %s53
      %s73 = sphi 0, %s73
      %s75 = sphi 0, %s73
      %s76 = sphi 0, %s75
      %s90 = sphi 0, %s76
      %s94 = sphi 0, %s94
      %s96 = sphi 0, %s94
      %s97 = sphi 0, %s96
      %s111 = sphi 0, %s97
      %s117 = sphi 0, %s119
      %s120 = sphi 0, %s117
      %s121 = sphi 0, %s120
      %s137 = sphi 0, %s121
    $region4: #{gcn_layer.1} parent=1 // loop_header_branch
      %16 = sbr.rel (%p14) target = $region8
    $region5: #{gcn_layer.1} parent=1 // loop_body
      %s18 = ssub.s32 %s13, 1
      %s19 = ssub.s32 %s13, 2
      %s20 = sadd.s32 %s13, 1
      %s21 = ssub.s32 %s13, %s20
      %p22 = scmp.eq.s32.totalorder %s21, 0
      %s24 = sadd.s32 %s23, 1
      %s25 = scalar_select %p22, %s23, %s24
      %p28 = pneg %p22
      %p29 = scmp.eq.s32.totalorder %s13, 1
      %p30 = por %p28, %p29
      %p31 = scmp.ne.s32.totalorder %s23, %s26
      %p32 = scmp.eq.s32.totalorder %s13, 0
      %p33 = por %p31, %p32
      %p34 = scmp.ne.s32.totalorder %s23, %s26
      %p35 = scmp.eq.s32.totalorder %s18, 1
      %p36 = por %p34, %p35
      %p37 = scmp.ne.s32.totalorder %s26, %s27
      %p38 = scmp.eq.s32.totalorder %s18, 0
      %p39 = por %p37, %p38
      %p40 = scmp.ne.s32.totalorder %s26, %s27
      %p41 = scmp.eq.s32.totalorder %s19, 1
      %p42 = por %p40, %p41
      %p44 = scmp.ne.s32.totalorder %s27, %s43
      %p45 = scmp.eq.s32.totalorder %s19, 0
      %p46 = por %p44, %p45
      %s47 = ssub.s32 %s13, %s20
      %p48 = scmp.eq.s32.totalorder %s47, 0
      %s50 = sadd.s32 %s49, 1
      %s51 = scalar_select %p48, %s49, %s50
      %p54 = pneg %p48
      %p55 = scmp.eq.s32.totalorder %s13, 1
      %p56 = por %p54, %p55
      %p57 = scmp.ne.s32.totalorder %s49, %s52
      %p58 = scmp.eq.s32.totalorder %s13, 0
      %p59 = por %p57, %p58
      %p60 = scmp.ne.s32.totalorder %s49, %s52
      %p61 = scmp.eq.s32.totalorder %s18, 1
      %p62 = por %p60, %p61
      %p63 = scmp.ne.s32.totalorder %s52, %s53
      %p64 = scmp.eq.s32.totalorder %s18, 0
      %p65 = por %p63, %p64
      %p66 = scmp.ne.s32.totalorder %s52, %s53
      %p67 = scmp.eq.s32.totalorder %s19, 1
      %p68 = por %p66, %p67
      %p70 = scmp.ne.s32.totalorder %s53, %s69
      %p71 = scmp.eq.s32.totalorder %s19, 0
      %p72 = por %p70, %p71
      %s74 = sadd.s32 %s73, 1
      %p77 = scmp.eq.s32.totalorder %s13, 1
      %p78 = scmp.ne.s32.totalorder %s73, %s75
      %p79 = scmp.eq.s32.totalorder %s13, 0
      %p80 = por %p78, %p79
      %p81 = scmp.ne.s32.totalorder %s73, %s75
      %p82 = scmp.eq.s32.totalorder %s18, 1
      %p83 = por %p81, %p82
      %p84 = scmp.ne.s32.totalorder %s75, %s76
      %p85 = scmp.eq.s32.totalorder %s18, 0
      %p86 = por %p84, %p85
      %p87 = scmp.ne.s32.totalorder %s75, %s76
      %p88 = scmp.eq.s32.totalorder %s19, 1
      %p89 = por %p87, %p88
      %p91 = scmp.ne.s32.totalorder %s76, %s90
      %p92 = scmp.eq.s32.totalorder %s19, 0
      %p93 = por %p91, %p92
      %s95 = sadd.s32 %s94, 1
      %p98 = scmp.eq.s32.totalorder %s13, 1
      %p99 = scmp.ne.s32.totalorder %s94, %s96
      %p100 = scmp.eq.s32.totalorder %s13, 0
      %p101 = por %p99, %p100
      %p102 = scmp.ne.s32.totalorder %s94, %s96
      %p103 = scmp.eq.s32.totalorder %s18, 1
      %p104 = por %p102, %p103
      %p105 = scmp.ne.s32.totalorder %s96, %s97
      %p106 = scmp.eq.s32.totalorder %s18, 0
      %p107 = por %p105, %p106
      %p108 = scmp.ne.s32.totalorder %s96, %s97
      %p109 = scmp.eq.s32.totalorder %s19, 1
      %p110 = por %p108, %p109
      %p112 = scmp.ne.s32.totalorder %s97, %s111
      %p113 = scmp.eq.s32.totalorder %s19, 0
      %p114 = por %p112, %p113
      %s115 = ssub.s32 %s13, %s20
      %p116 = scmp.eq.s32.totalorder %s115, 0
      %s118 = sadd.s32 %s117, 1
      %s119 = scalar_select %p116, %s117, %s118
      %p122 = pneg %p116
      %p123 = scmp.eq.s32.totalorder %s13, 1
      %p124 = por %p122, %p123
      %p125 = scmp.ne.s32.totalorder %s117, %s120
      %p126 = scmp.eq.s32.totalorder %s13, 0
      %p127 = por %p125, %p126
      %p128 = scmp.ne.s32.totalorder %s117, %s120
      %p129 = scmp.eq.s32.totalorder %s18, 1
      %p130 = por %p128, %p129
      %p131 = scmp.ne.s32.totalorder %s120, %s121
      %p132 = scmp.eq.s32.totalorder %s18, 0
      %p133 = por %p131, %p132
      %p134 = scmp.ne.s32.totalorder %s120, %s121
      %p135 = scmp.eq.s32.totalorder %s19, 1
      %p136 = por %p134, %p135
      %p138 = scmp.ne.s32.totalorder %s121, %s137
      %p139 = scmp.eq.s32.totalorder %s19, 0
      %p140 = por %p138, %p139
      %p141 = scmp.le.s32.totalorder 1, %s13
      %p142 = scmp.lt.s32.totalorder %s13, 3
      %p143 = pnand %p141, %p142
      %p144 = pneg %p143
      // Predicated region
      $region9: #{gcn_layer.1} parent=5 // pred_check
        _
      $region10: #{gcn_layer.1} parent=5 // pred_check_branch
        %146 = sbr.rel (%p143) target = $region12
      $region11: #{gcn_layer.1} parent=5 // pred_region
        %s147 = ssub.s32 %s13, 1
        // Predicated region
        $region13: #{gcn_layer.1} parent=11 // pred_check
          %p148 = pneg %p86
        $region14: #{gcn_layer.1} parent=11 // pred_check_branch
          %150 = sbr.rel (%p148) target = $region16
        $region15: #{gcn_layer.1} parent=11 // pred_region
          _
        $region16: #{gcn_layer.1} parent=11 // pred_fallthru
          _
        // Predicated region
        $region17: #{gcn_layer.1} parent=11 // pred_check
          %p151 = pneg %p107
        $region18: #{gcn_layer.1} parent=11 // pred_check_branch
          %153 = sbr.rel (%p151) target = $region20
        $region19: #{gcn_layer.1} parent=11 // pred_region
          _
        $region20: #{gcn_layer.1} parent=11 // pred_fallthru
          _
      $region12: #{gcn_layer.1} parent=5 // pred_fallthru
        _
      %p154 = scmp.lt.s32.totalorder %s13, 2
      // Predicated region
      $region21: #{gcn_layer.1} parent=5 // pred_check
        %p155 = pneg %p154
      $region22: #{gcn_layer.1} parent=5 // pred_check_branch
        %157 = sbr.rel (%p155) target = $region24
      $region23: #{gcn_layer.1} parent=5 // pred_region
        // Predicated region
        $region25: #{gcn_layer.1} parent=23 // pred_check
          %p158 = pneg %p33
        $region26: #{gcn_layer.1} parent=23 // pred_check_branch
          %160 = sbr.rel (%p158) target = $region28
        $region27: #{gcn_layer.1} parent=23 // pred_region
          %s161 = smul.u32 4, %s13
          %p162 = scmp.lt.s32.totalorder %s161, 7
          %s163 = scalar_select %p162, %s161, 7
          %s164 = smul.addr %s163, 4
          %s165 = scalar_lea.vmem %s0, %s164
          %s166 = smul.u32 4, %s13
        $region28: #{gcn_layer.1} parent=23 // pred_fallthru
          _
        // Predicated region
        $region29: #{gcn_layer.1} parent=23 // pred_check
          %p167 = pneg %p59
        $region30: #{gcn_layer.1} parent=23 // pred_check_branch
          %169 = sbr.rel (%p167) target = $region32
        $region31: #{gcn_layer.1} parent=23 // pred_region
          %s170 = smul.u32 4, %s13
          %p171 = scmp.lt.s32.totalorder %s170, 7
          %s172 = scalar_select %p171, %s170, 7
          %s173 = smul.addr %s172, 4
          %s174 = scalar_lea.vmem %s1, %s173
          %s175 = smul.u32 4, %s13
        $region32: #{gcn_layer.1} parent=23 // pred_fallthru
          _
      $region24: #{gcn_layer.1} parent=5 // pred_fallthru
        _
      %p176 = scmp.le.s32.totalorder 1, %s13
      %p177 = scmp.lt.s32.totalorder %s13, 3
      %p178 = pnand %p176, %p177
      %p179 = pneg %p178
      // Predicated region
      $region33: #{gcn_layer.1} parent=5 // pred_check
        _
      $region34: #{gcn_layer.1} parent=5 // pred_check_branch
        %181 = sbr.rel (%p178) target = $region36
      $region35: #{gcn_layer.1} parent=5 // pred_region
        %s182 = ssub.s32 %s13, 1
        %s183 = smul.u32 4, %s18
        %p184 = scmp.lt.s32.totalorder %s183, 7
        %s185 = scalar_select %p184, %s183, 7
        %s186 = smul.addr %s185, 4
        %s187 = scalar_lea.vmem %s0, %s186
        %p188 = pneg %p39
        %p189 = pneg %p36
        %s190 = smul.u32 4, %s18
        %p191 = scmp.lt.s32.totalorder %s190, 7
        %s192 = scalar_select %p191, %s190, 7
        %s193 = smul.addr %s192, 4
        %s194 = scalar_lea.vmem %s1, %s193
        %p195 = pneg %p65
        %p196 = pneg %p62
        %p197 = pneg %p86
        %p198 = pneg %p83
        %p199 = pneg %p107
        %p200 = pneg %p104
        %p201 = pneg %p133
        %p202 = pneg %p130
        %s203 = sand.u32 %s120, 1
        %s204 = scalar_lea.sflag [#allocation3], %s203
        %s205 = sand.u32 %s120, 1
        %s206 = smul.addr %s205, 32
        %s207 = scalar_lea.vmem [#allocation2], %s206
        %s208 = smul.u32 4, %s18
        %p209 = scmp.lt.s32.totalorder %s208, 7
        %s210 = scalar_select %p209, %s208, 7
        %s211 = smul.addr %s210, 4
        %s212 = scalar_lea.vmem %s0, %s211
        %s213 = smul.u32 4, %s18
        %s214 = smul.u32 4, %s18
        %p215 = scmp.lt.s32.totalorder %s214, 7
        %s216 = scalar_select %p215, %s214, 7
        %s217 = smul.addr %s216, 4
        %s218 = scalar_lea.vmem %s1, %s217
        %s219 = smul.u32 4, %s18
        %s220 = smul.u32 4, %s18
        %v222 = vld [vmem:[%s218] sm:$0xf]
        %v223 = vld [vmem:[%s218 + $0x4] sm:$0xf]
        %v224 = vld [vmem:[%s218 + $0x8] sm:$0xf]
        %v225 = vld [vmem:[%s218 + $0xc] sm:$0xf]
        %v226 = vld [vmem:[%s212] sm:$0xf]
        %v227 = vld [vmem:[%s212 + $0x4] sm:$0xf]
        %v228 = vld [vmem:[%s212 + $0x8] sm:$0xf]
        %v229 = vld [vmem:[%s212 + $0xc] sm:$0xf]
        %v234 = vunpack.c.l.b16 %v222
        %v235 = vunpack.c.l.b16 %v223
        %v236 = vunpack.c.l.b16 %v224
        %v237 = vunpack.c.l.b16 %v225
        %v238 = vpack.c.b16 %v235, %v234
        %v239 = vpack.c.b16 %v237, %v236
        %v244 = vunpack.c.l.b16 %v226
        %v245 = vunpack.c.l.b16 %v227
        %v246 = vunpack.c.l.b16 %v228
        %v247 = vunpack.c.l.b16 %v229
        %v248 = vpack.c.b16 %v245, %v244
        %v249 = vpack.c.b16 %v247, %v246
        %vm252 = vcmask 261120
        %v254 = vsel %vm252, %v238, 0
        %v257 = vsel %vm252, %v239, 0
        %259 = vmatprep.subr.bf16.mxu0 0
        %260 = vmatpush1.bf16.msra.mxu0 %v248
        %261 = vmatprep.subr.bf16.mxu0 0
        %262 = vmatpush1.bf16.msra.mxu0 %v249
        %263 = vmatprep.subr.bf16.mxu0 0
        %264 = vmatpush1.bf16.msra.mxu0 0
        %265 = vmatprep.subr.bf16.mxu0 0
        %266 = vmatpush1.bf16.msra.mxu0 0
        %267 = vmatprep.subr.bf16.mxu0 0
        %268 = vmatpush1.bf16.msra.mxu0 0
        %269 = vmatprep.subr.bf16.mxu0 0
        %270 = vmatpush1.bf16.msra.mxu0 0
        %271 = vmatprep.subr.bf16.mxu0 0
        %272 = vmatpush1.bf16.msra.mxu0 0
        %273 = vmatprep.subr.bf16.mxu0 0
        %274 = vmatpush1.bf16.msra.mxu0 0
        %275 = vmatprep.subr.bf16.mxu0 0
        %276 = vmatpush1.bf16.msra.mxu0 0
        %277 = vmatprep.subr.bf16.mxu0 0
        %278 = vmatpush1.bf16.msra.mxu0 0
        %279 = vmatprep.subr.bf16.mxu0 0
        %280 = vmatpush1.bf16.msra.mxu0 0
        %281 = vmatprep.subr.bf16.mxu0 0
        %282 = vmatpush1.bf16.msra.mxu0 0
        %283 = vmatprep.subr.bf16.mxu0 0
        %284 = vmatpush1.bf16.msra.mxu0 0
        %285 = vmatprep.subr.bf16.mxu0 0
        %286 = vmatpush1.bf16.msra.mxu0 0
        %287 = vmatprep.subr.bf16.mxu0 0
        %288 = vmatpush1.bf16.msra.mxu0 0
        %289 = vmatprep.subr.bf16.mxu0 0
        %290 = vmatpush1.bf16.msra.mxu0 0
        %291 = vmatprep.mubr.bf16.mxu0 0
        %292 = vmatmul.mubr.bf16.gmra.mrb[0].mxu0 %v254
        %v293 = vpop.f32.mrb[0].mxu0
        %v294 = vadd.f32 0.0, %v293
        %v295 = vpop.f32.mrb[0].mxu0
        %v296 = vpop.f32.mrb[0].mxu0
        %v297 = vadd.f32 0.0, %v296
        %v298 = vpop.f32.mrb[0].mxu0
        %299 = vmatprep.mubr.bf16.mxu0 0
        %300 = vmatmul.mubr.bf16.gmra.mrb[0].mxu0 %v257
        %v301 = vpop.f32.mrb[0].mxu0
        %v302 = vadd.f32 0.0, %v301
        %v303 = vpop.f32.mrb[0].mxu0
        %v304 = vpop.f32.mrb[0].mxu0
        %v305 = vadd.f32 0.0, %v304
        %v306 = vpop.f32.mrb[0].mxu0
        %307 = vdwg.mxu0
        %v308 = vpack.c.bf16 %v297, %v294
        %v309 = vpack.c.bf16 %v305, %v302
        %v310 = vld [vmem:[%s2] sm:$0xf]
        %v311 = vld [vmem:[%s2 + $0x4] sm:$0xf]
        %v312 = vld [vmem:[%s2 + $0x8] sm:$0xf]
        %v313 = vld [vmem:[%s2 + $0xc] sm:$0xf]
        %v314 = vld [vmem:[%s2 + $0x10] sm:$0xf]
        %v315 = vld [vmem:[%s2 + $0x14] sm:$0xf]
        %v316 = vld [vmem:[%s2 + $0x18] sm:$0xf]
        %v317 = vld [vmem:[%s2 + $0x1c] sm:$0xf]
        %v318 = vld [vmem:[%s2 + $0x20] sm:$0xf]
        %v319 = vld [vmem:[%s2 + $0x24] sm:$0xf]
        %v320 = vld [vmem:[%s2 + $0x28] sm:$0xf]
        %v321 = vld [vmem:[%s2 + $0x2c] sm:$0xf]
        %v322 = vld [vmem:[%s2 + $0x30] sm:$0xf]
        %v323 = vld [vmem:[%s2 + $0x34] sm:$0xf]
        %v324 = vld [vmem:[%s2 + $0x38] sm:$0xf]
        %v325 = vld [vmem:[%s2 + $0x3c] sm:$0xf]
        %v326 = vld [vmem:[%s3] sm:$0x1]
        %v328 = vlaneseq
        %v329 = vshrl.u32 %v328, 7
        %v330 = vsub.s32 0, %v329
        %v331 = vrot.slane %v326, %v330
        %v349 = vunpack.c.l.b16 %v310
        %v350 = vunpack.c.l.b16 %v311
        %v351 = vunpack.c.l.b16 %v312
        %v352 = vunpack.c.l.b16 %v313
        %v353 = vunpack.c.l.b16 %v314
        %v354 = vunpack.c.l.b16 %v315
        %v355 = vunpack.c.l.b16 %v316
        %v356 = vunpack.c.l.b16 %v317
        %v357 = vunpack.c.l.b16 %v318
        %v358 = vunpack.c.l.b16 %v319
        %v359 = vunpack.c.l.b16 %v320
        %v360 = vunpack.c.l.b16 %v321
        %v361 = vunpack.c.l.b16 %v322
        %v362 = vunpack.c.l.b16 %v323
        %v363 = vunpack.c.l.b16 %v324
        %v364 = vunpack.c.l.b16 %v325
        %v365 = vpack.c.b16 %v350, %v349
        %v366 = vpack.c.b16 %v352, %v351
        %v367 = vpack.c.b16 %v354, %v353
        %v368 = vpack.c.b16 %v356, %v355
        %v369 = vpack.c.b16 %v358, %v357
        %v370 = vpack.c.b16 %v360, %v359
        %v371 = vpack.c.b16 %v362, %v361
        %v372 = vpack.c.b16 %v364, %v363
        %381 = vmatprep.subr.bf16.mxu0 0
        %382 = vmatpush1.bf16.msra.mxu0 %v365
        %383 = vmatprep.subr.bf16.mxu0 0
        %384 = vmatpush1.bf16.msra.mxu0 %v366
        %385 = vmatprep.subr.bf16.mxu0 0
        %386 = vmatpush1.bf16.msra.mxu0 %v367
        %387 = vmatprep.subr.bf16.mxu0 0
        %388 = vmatpush1.bf16.msra.mxu0 %v368
        %389 = vmatprep.subr.bf16.mxu0 0
        %390 = vmatpush1.bf16.msra.mxu0 %v369
        %391 = vmatprep.subr.bf16.mxu0 0
        %392 = vmatpush1.bf16.msra.mxu0 %v370
        %393 = vmatprep.subr.bf16.mxu0 0
        %394 = vmatpush1.bf16.msra.mxu0 %v371
        %395 = vmatprep.subr.bf16.mxu0 0
        %396 = vmatpush1.bf16.msra.mxu0 %v372
        %397 = vmatprep.subr.bf16.mxu0 0
        %398 = vmatpush1.bf16.msra.mxu0 0
        %399 = vmatprep.subr.bf16.mxu0 0
        %400 = vmatpush1.bf16.msra.mxu0 0
        %401 = vmatprep.subr.bf16.mxu0 0
        %402 = vmatpush1.bf16.msra.mxu0 0
        %403 = vmatprep.subr.bf16.mxu0 0
        %404 = vmatpush1.bf16.msra.mxu0 0
        %405 = vmatprep.subr.bf16.mxu0 0
        %406 = vmatpush1.bf16.msra.mxu0 0
        %407 = vmatprep.subr.bf16.mxu0 0
        %408 = vmatpush1.bf16.msra.mxu0 0
        %409 = vmatprep.subr.bf16.mxu0 0
        %410 = vmatpush1.bf16.msra.mxu0 0
        %411 = vmatprep.subr.bf16.mxu0 0
        %412 = vmatpush1.bf16.msra.mxu0 0
        %413 = vmatprep.mubr.bf16.mxu0 0
        %414 = vmatmul.mubr.bf16.gmra.mrb[0].mxu0 %v308
        %v415 = vpop.f32.mrb[0].mxu0
        %v416 = vadd.f32 %v331, %v415
        %v417 = vpop.f32.mrb[0].mxu0
        %v418 = vpop.f32.mrb[0].mxu0
        %v419 = vadd.f32 %v331, %v418
        %v420 = vpop.f32.mrb[0].mxu0
        %421 = vmatprep.mubr.bf16.mxu0 0
        %422 = vmatmul.mubr.bf16.gmra.mrb[0].mxu0 %v309
        %v423 = vpop.f32.mrb[0].mxu0
        %v424 = vadd.f32 %v331, %v423
        %v425 = vpop.f32.mrb[0].mxu0
        %v426 = vpop.f32.mrb[0].mxu0
        %v427 = vadd.f32 %v331, %v426
        %v428 = vpop.f32.mrb[0].mxu0
        %429 = vdwg.mxu0
        %v430 = vmax.f32 %v416, 0.0
        %v431 = vmax.f32 %v419, 0.0
        %v432 = vmax.f32 %v424, 0.0
        %v433 = vmax.f32 %v427, 0.0
        %434 = vst [vmem:[%s207] sm:$0xff] %v430
        %435 = vst [vmem:[%s207 + $0x8] sm:$0xff] %v431
        %436 = vst [vmem:[%s207 + $0x10] sm:$0xff] %v432
        %437 = vst [vmem:[%s207 + $0x18] sm:$0xff] %v433
        %s438 = sand.u32 %s120, 1
        %s439 = scalar_lea.sflag [#allocation3], %s438
        %s440 = sand.u32 %s120, 1
        %s441 = smul.addr %s440, 32
        %s442 = scalar_lea.vmem [#allocation2], %s441
        // Predicated region
        $region37: #{gcn_layer.1} parent=35 // pred_check
          %p443 = pneg %p130
        $region38: #{gcn_layer.1} parent=35 // pred_check_branch
          %445 = sbr.rel (%p443) target = $region40
        $region39: #{gcn_layer.1} parent=35 // pred_region
          %s446 = smul.u32 4, %s18
          %s448 = ssub.s32 512, 512
          %449 = vsyncadd %s439, %s448
          %s450 = smul.addr %s446, 128
          %s451 = scalar_lea.hbm %s4, %s450
          %s452 = sshll.u32 %s442, 4
          %s453 = int_to_ptr.vmem [resolvable:$true] %s452
          %458 = dma.vmem_to_hbm [thread:$0]  %s453, 512, %s451, %s439, 128, 128, 8
        $region40: #{gcn_layer.1} parent=35 // pred_fallthru
          _
      $region36: #{gcn_layer.1} parent=5 // pred_fallthru
        _
      %p459 = scmp.le.s32.totalorder 2, %s13
      // Predicated region
      $region41: #{gcn_layer.1} parent=5 // pred_check
        %p460 = pneg %p459
      $region42: #{gcn_layer.1} parent=5 // pred_check_branch
        %462 = sbr.rel (%p460) target = $region44
      $region43: #{gcn_layer.1} parent=5 // pred_region
        %s463 = ssub.s32 %s13, 2
        // Predicated region
        $region45: #{gcn_layer.1} parent=43 // pred_check
          %p464 = pneg %p136
        $region46: #{gcn_layer.1} parent=43 // pred_check_branch
          %466 = sbr.rel (%p464) target = $region48
        $region47: #{gcn_layer.1} parent=43 // pred_region
          %s467 = sand.u32 %s121, 1
          %s468 = scalar_lea.sflag [#allocation3], %s467
          %s469 = sand.u32 %s121, 1
          %s470 = smul.addr %s469, 32
          %s471 = scalar_lea.vmem [#allocation2], %s470
          %472 = dma.done %s468, 512
        $region48: #{gcn_layer.1} parent=43 // pred_fallthru
          _
      $region44: #{gcn_layer.1} parent=5 // pred_fallthru
        _
    $region6: #{gcn_layer.1} parent=1 // loop_footer
      %s17 = sadd.s32 1, %s13
    $region7: #{gcn_layer.1} parent=1 // loop_footer_branch
      %12 = sbr.rel target = $region3
    $region8: #{gcn_layer.1} parent=1 // loop_exit
      _
    %473 = vsyncpa [#allocation3], 1
    %s474 = scalar_lea.sflag [#allocation3], 1
    %475 = vsyncpa %s474, 1

</llo_original>
